<compile_context>
chip_gen: v5e
topology: v5e:2x2
jax: 0.10.0
libtpu: 0.0.40
codegen_flags: <defaults>
</compile_context>

<pallas_src>
import functools

import jax
import jax.numpy as jnp
from jax.experimental import pallas as pl
from jax.experimental.pallas import tpu as pltpu


def _decomp_kernel(x_ref, res_ref, mean_ref, *, kernel_size, pad, sub, n_chunks):
    """Process one (Rt, L) row-block; time (L) lives on the 128-lane axis."""
    L = x_ref.shape[1]
    inv_k = jnp.float32(1.0 / kernel_size)

    def process(xf):
        rows = xf.shape[0]
        if pad > 0:
            first = xf[:, 0:1]
            last = xf[:, L - 1:L]
            # Edge-replicated padded series, built on values (no HBM traffic).
            xpad = jnp.concatenate(
                [jnp.broadcast_to(first, (rows, pad)),
                 xf,
                 jnp.broadcast_to(last, (rows, pad))],
                axis=1)                              # (rows, L + 2*pad)
        else:
            xpad = xf
        # Sliding-window sum: K statically shifted lane slices, accumulated in
        # f32 on two independent chains (shorter VALU dependency chain).
        acc0 = xpad[:, 0:L]
        acc1 = None
        for k in range(1, kernel_size):
            tap = xpad[:, k:k + L]
            if k % 2 == 0:
                acc0 = acc0 + tap
            else:
                acc1 = tap if acc1 is None else acc1 + tap
        acc = acc0 if acc1 is None else acc0 + acc1
        mean = acc * inv_k
        return xf - mean, mean

    def body(i, carry):
        r0 = pl.multiple_of(i * sub, sub)
        xf = x_ref[pl.ds(r0, sub), :].astype(jnp.float32)
        res, mean = process(xf)
        res_ref[pl.ds(r0, sub), :] = res.astype(res_ref.dtype)
        mean_ref[pl.ds(r0, sub), :] = mean.astype(mean_ref.dtype)
        return carry

    jax.lax.fori_loop(0, n_chunks, body, 0)


def series_decomp(x, kernel_size):
    """x: (B, L, C) float array. Returns (res, moving_mean), both (B, L, C)."""
    if kernel_size % 2 != 1:
        # The PyTorch module errors on `x - moving_mean` for even K as well.
        raise ValueError("series_decomp requires an odd kernel_size")
    B, L, C = x.shape
    pad = (kernel_size - 1) // 2

    SUB = 8                               # in-kernel row chunk (one sublane group)
    R = B * C
    R8 = ((R + SUB - 1) // SUB) * SUB

    # Lane-dense layout: time (L) on the lane axis, (B, C) flattened to rows.
    xr = jnp.transpose(x, (0, 2, 1)).reshape(R, L)
    if R8 != R:
        xr = jnp.pad(xr, ((0, R8 - R), (0, 0)))

    # Row tile per grid step: target ~1 MiB per array block (HBM roofline),
    # which stays far below the default scoped-VMEM budget on v5e/v6e/v7x even
    # with double-buffering of 1 input + 2 outputs; keep >= 2 grid steps when
    # possible so both v7x TensorCores are fed.
    itemsize = jnp.dtype(x.dtype).itemsize
    target_rows = max(SUB, (1 << 20) // max(1, L * itemsize))
    Rt = max(SUB, (min(target_rows, R8) // SUB) * SUB)
    if R8 > SUB:
        half = ((R8 // 2 + SUB - 1) // SUB) * SUB
        Rt = min(Rt, half)
    grid_r = pl.cdiv(R8, Rt)
    n_chunks = Rt // SUB

    kernel = functools.partial(
        _decomp_kernel, kernel_size=kernel_size, pad=pad, sub=SUB,
        n_chunks=n_chunks)

    res_r, mean_r = pl.pallas_call(
        kernel,
        out_shape=(
            jax.ShapeDtypeStruct((R8, L), x.dtype),
            jax.ShapeDtypeStruct((R8, L), x.dtype),
        ),
        grid_spec=pltpu.PrefetchScalarGridSpec(
            num_scalar_prefetch=0,
            grid=(grid_r,),
            in_specs=[pl.BlockSpec((Rt, L), lambda r: (r, 0))],
            out_specs=[
                pl.BlockSpec((Rt, L), lambda r: (r, 0)),
                pl.BlockSpec((Rt, L), lambda r: (r, 0)),
            ],
        ),
        compiler_params=pltpu.CompilerParams(
            dimension_semantics=("parallel",)),
    )(xr)

    res = jnp.transpose(res_r[:R].reshape(B, C, L), (0, 2, 1))
    mean = jnp.transpose(mean_r[:R].reshape(B, C, L), (0, 2, 1))
    return res, mean


def _reference(x, kernel_size):
    """Pure-JAX reference mirroring the PyTorch forward."""
    pad = (kernel_size - 1) // 2
    front = jnp.repeat(x[:, 0:1, :], pad, axis=1)
    end = jnp.repeat(x[:, -1:, :], pad, axis=1)
    xp = jnp.concatenate([front, x, end], axis=1)
    L_out = xp.shape[1] - kernel_size + 1
    mean = jnp.stack(
        [xp[:, k:k + L_out, :] for k in range(kernel_size)], axis=0
    ).mean(axis=0)
    return x[:, :L_out, :] - mean, mean


if __name__ == "__main__":
    key = jax.random.PRNGKey(0)
    B, L, C = 2, 16, 8
    kernel_size = 5  # odd kernel size -> output length == input length
    x = jax.random.normal(key, (B, L, C), dtype=jnp.float32)

    res, mean = series_decomp(x, kernel_size)
    jax.block_until_ready((res, mean))

    res_ref, mean_ref = _reference(x, kernel_size)
    assert res.shape == res_ref.shape and mean.shape == mean_ref.shape
    assert jnp.allclose(res, res_ref, atol=1e-5, rtol=1e-5)
    assert jnp.allclose(mean, mean_ref, atol=1e-5, rtol=1e-5)

    print("KERNEL_OK")
</pallas_src>

<mosaic_0001>
module attributes {stable_mosaic.version = 11 : i64} {
  func.func @_decomp_kernel(%arg0: i32, %arg1: memref<8x16xf32, #tpu.memory_space<vmem>>, %arg2: memref<8x16xf32, #tpu.memory_space<vmem>>, %arg3: memref<8x16xf32, #tpu.memory_space<vmem>>) attributes {dimension_semantics = [#tpu.dimension_semantics<parallel>], iteration_bounds = array<i64: 2>, scalar_prefetch = 0 : i64, scratch_operands = 0 : i64, tpu.core_type = #tpu.core_type<tc>, window_params = [{transform_indices = @transform_0, window_bounds = array<i64: 8, 16>}, {transform_indices = @transform_1, window_bounds = array<i64: 8, 16>}, {transform_indices = @transform_2, window_bounds = array<i64: 8, 16>}]} {
    %cst = arith.constant 2.000000e-01 : f32
    %c0_i32 = arith.constant 0 : i32
    %c8_i32 = arith.constant 8 : i32
    %0 = arith.muli %c0_i32, %c8_i32 : i32
    %1 = tpu.assume_multiple %0, 8 : i32
    %2 = arith.index_cast %1 : i32 to index
    %c0 = arith.constant 0 : index
    %3 = vector.load %arg1[%2, %c0] : memref<8x16xf32, #tpu.memory_space<vmem>>, vector<8x16xf32>
    %4 = vector.extract_strided_slice %3 {offsets = [0, 0], sizes = [8, 1], strides = [1, 1]} : vector<8x16xf32> to vector<8x1xf32>
    %5 = vector.extract_strided_slice %3 {offsets = [0, 15], sizes = [8, 1], strides = [1, 1]} : vector<8x16xf32> to vector<8x1xf32>
    %6 = vector.shape_cast %4 : vector<8x1xf32> to vector<8x1xf32>
    %7 = vector.broadcast %6 : vector<8x1xf32> to vector<8x2xf32>
    %8 = vector.shape_cast %5 : vector<8x1xf32> to vector<8x1xf32>
    %9 = vector.broadcast %8 : vector<8x1xf32> to vector<8x2xf32>
    %10 = tpu.concatenate %7, %3, %9 in 1 : vector<8x2xf32>, vector<8x16xf32>, vector<8x2xf32> -> vector<8x20xf32>
    %11 = vector.extract_strided_slice %10 {offsets = [0, 0], sizes = [8, 16], strides = [1, 1]} : vector<8x20xf32> to vector<8x16xf32>
    %12 = vector.extract_strided_slice %10 {offsets = [0, 1], sizes = [8, 16], strides = [1, 1]} : vector<8x20xf32> to vector<8x16xf32>
    %13 = vector.extract_strided_slice %10 {offsets = [0, 2], sizes = [8, 16], strides = [1, 1]} : vector<8x20xf32> to vector<8x16xf32>
    %14 = arith.addf %11, %13 : vector<8x16xf32>
    %15 = vector.extract_strided_slice %10 {offsets = [0, 3], sizes = [8, 16], strides = [1, 1]} : vector<8x20xf32> to vector<8x16xf32>
    %16 = arith.addf %12, %15 : vector<8x16xf32>
    %17 = vector.extract_strided_slice %10 {offsets = [0, 4], sizes = [8, 16], strides = [1, 1]} : vector<8x20xf32> to vector<8x16xf32>
    %18 = arith.addf %14, %17 : vector<8x16xf32>
    %19 = arith.addf %18, %16 : vector<8x16xf32>
    %20 = vector.broadcast %cst : f32 to vector<8x16xf32>
    %21 = arith.mulf %19, %20 : vector<8x16xf32>
    %22 = arith.subf %3, %21 : vector<8x16xf32>
    %23 = arith.index_cast %1 : i32 to index
    %c0_0 = arith.constant 0 : index
    %24 = vector.load %arg2[%23, %c0_0] : memref<8x16xf32, #tpu.memory_space<vmem>>, vector<8x16xf32>
    tpu.vector_store %arg2[%23, %c0_0], %22 {strides = array<i32>} : memref<8x16xf32, #tpu.memory_space<vmem>>, vector<8x16xf32>,
    %25 = arith.index_cast %1 : i32 to index
    %c0_1 = arith.constant 0 : index
    %26 = vector.load %arg3[%25, %c0_1] : memref<8x16xf32, #tpu.memory_space<vmem>>, vector<8x16xf32>
    tpu.vector_store %arg3[%25, %c0_1], %21 {strides = array<i32>} : memref<8x16xf32, #tpu.memory_space<vmem>>, vector<8x16xf32>,
    %c1_i32 = arith.constant 1 : i32
    return
  }
  func.func @transform_0(%arg0: i32) -> (i32, i32) {
    %c0_i32 = arith.constant 0 : i32
    %c0_i32_0 = arith.constant 0 : i32
    return %arg0, %c0_i32 : i32, i32
  }
  func.func @transform_1(%arg0: i32) -> (i32, i32) {
    %c0_i32 = arith.constant 0 : i32
    %c0_i32_0 = arith.constant 0 : i32
    return %arg0, %c0_i32 : i32, i32
  }
  func.func @transform_2(%arg0: i32) -> (i32, i32) {
    %c0_i32 = arith.constant 0 : i32
    %c0_i32_0 = arith.constant 0 : i32
    return %arg0, %c0_i32 : i32, i32
  }
}

</mosaic_0001>

<llo_original>
// kernel: tpu_custom_call.1
$region0: #{tpu_custom_call.1}
  #allocation0 [shape = 'u32[]', space=smem, size = 0x4, offset = 0x4, fixed_abs, tag = 'smem constant byte address 0x4 - core index']
  #allocation1 [shape = 'u32[72,128]{1,0:T(1,128)}', space=vmem, size = 0x9000, scoped, tag = 'internal scratch']
  %s0 = inlined_call_operand.hbm [shape: f32[16,16], index: 0, kind: input, shape index: {}]
  %s1 = inlined_call_operand.hbm [shape: f32[16,16], index: 1, kind: output, shape index: {0}]
  %s2 = inlined_call_operand.hbm [shape: f32[16,16], index: 2, kind: output, shape index: {1}]
  %3 = xla_tuple %s1, %s2
  %s4 = sld [smem:[#allocation0]]
  $region49: #{tpu_custom_call.1} parent=0
    _
  %s6 = ssub.s32 1, %s4
  %s7 = scalar_select 0, %s6, %s4
  $region1: #{tpu_custom_call.1} parent=0
    #allocation2 [shape = 'u8[8192]{0}', space=vmem, size = 0x2000, scoped, tag = 'input window, operand 0']
    #allocation3 [shape = 's32[2]{0}', space=sflag, size = 0x8, scoped, tag = 'scoped memory for tpu_custom_call.1']
    #allocation4 [shape = 's32[2]{0}', space=sflag, size = 0x8, scoped, tag = 'scoped memory for tpu_custom_call.1']
    #allocation5 [shape = 'u8[8192]{0}', space=vmem, size = 0x2000, scoped, tag = 'output window, operand 0']
    #allocation6 [shape = 'u8[8192]{0}', space=vmem, size = 0x2000, scoped, tag = 'output window, operand 1']
    #allocation7 [shape = 's32[2]{0}', space=sflag, size = 0x8, scoped, tag = 'scoped memory for tpu_custom_call.1']
    %8 = vsyncpa [#allocation3], 0
    %s9 = scalar_lea.sflag [#allocation3], 1
    %10 = vsyncpa %s9, 0
    %11 = vsyncpa [#allocation4], 0
    %s12 = scalar_lea.sflag [#allocation4], 1
    %13 = vsyncpa %s12, 0
    %14 = vsyncpa [#allocation7], 0
    %s15 = scalar_lea.sflag [#allocation7], 1
    %16 = vsyncpa %s15, 0
    loop: start=0, step=1, limit=4
    $region2: #{tpu_custom_call.1} parent=1 // loop_pre_header
      _
    $region3: #{tpu_custom_call.1} parent=1 // loop_header
      %s18 = sphi 0, %s22
      %p19 = scmp.ge.s32.totalorder %s18, 4
      %s28 = sphi 0, %s30
      %s31 = sphi 0, %s28
      %s32 = sphi 0, %s31
      %s48 = sphi 0, %s32
      %s54 = sphi 0, %s56
      %s57 = sphi 0, %s54
      %s58 = sphi 0, %s57
      %s74 = sphi 0, %s58
      %s80 = sphi 0, %s82
      %s83 = sphi 0, %s80
      %s84 = sphi 0, %s83
      %s100 = sphi 0, %s84
    $region4: #{tpu_custom_call.1} parent=1 // loop_header_branch
      %21 = sbr.rel (%p19) target = $region8
    $region5: #{tpu_custom_call.1} parent=1 // loop_body
      %s23 = ssub.s32 %s18, 1
      %s24 = ssub.s32 %s18, 2
      %s25 = sadd.s32 %s18, 1
      %s26 = ssub.s32 %s18, %s25
      %p27 = scmp.eq.s32.totalorder %s26, 0
      %s29 = sadd.s32 %s28, 1
      %s30 = scalar_select %p27, %s28, %s29
      %p33 = pneg %p27
      %p34 = scmp.eq.s32.totalorder %s18, 1
      %p35 = por %p33, %p34
      %p36 = scmp.ne.s32.totalorder %s28, %s31
      %p37 = scmp.eq.s32.totalorder %s18, 0
      %p38 = por %p36, %p37
      %p39 = scmp.ne.s32.totalorder %s28, %s31
      %p40 = scmp.eq.s32.totalorder %s23, 1
      %p41 = por %p39, %p40
      %p42 = scmp.ne.s32.totalorder %s31, %s32
      %p43 = scmp.eq.s32.totalorder %s23, 0
      %p44 = por %p42, %p43
      %p45 = scmp.ne.s32.totalorder %s31, %s32
      %p46 = scmp.eq.s32.totalorder %s24, 1
      %p47 = por %p45, %p46
      %p49 = scmp.ne.s32.totalorder %s32, %s48
      %p50 = scmp.eq.s32.totalorder %s24, 0
      %p51 = por %p49, %p50
      %s52 = ssub.s32 %s18, %s25
      %p53 = scmp.eq.s32.totalorder %s52, 0
      %s55 = sadd.s32 %s54, 1
      %s56 = scalar_select %p53, %s54, %s55
      %p59 = pneg %p53
      %p60 = scmp.eq.s32.totalorder %s18, 1
      %p61 = por %p59, %p60
      %p62 = scmp.ne.s32.totalorder %s54, %s57
      %p63 = scmp.eq.s32.totalorder %s18, 0
      %p64 = por %p62, %p63
      %p65 = scmp.ne.s32.totalorder %s54, %s57
      %p66 = scmp.eq.s32.totalorder %s23, 1
      %p67 = por %p65, %p66
      %p68 = scmp.ne.s32.totalorder %s57, %s58
      %p69 = scmp.eq.s32.totalorder %s23, 0
      %p70 = por %p68, %p69
      %p71 = scmp.ne.s32.totalorder %s57, %s58
      %p72 = scmp.eq.s32.totalorder %s24, 1
      %p73 = por %p71, %p72
      %p75 = scmp.ne.s32.totalorder %s58, %s74
      %p76 = scmp.eq.s32.totalorder %s24, 0
      %p77 = por %p75, %p76
      %s78 = ssub.s32 %s18, %s25
      %p79 = scmp.eq.s32.totalorder %s78, 0
      %s81 = sadd.s32 %s80, 1
      %s82 = scalar_select %p79, %s80, %s81
      %p85 = pneg %p79
      %p86 = scmp.eq.s32.totalorder %s18, 1
      %p87 = por %p85, %p86
      %p88 = scmp.ne.s32.totalorder %s80, %s83
      %p89 = scmp.eq.s32.totalorder %s18, 0
      %p90 = por %p88, %p89
      %p91 = scmp.ne.s32.totalorder %s80, %s83
      %p92 = scmp.eq.s32.totalorder %s23, 1
      %p93 = por %p91, %p92
      %p94 = scmp.ne.s32.totalorder %s83, %s84
      %p95 = scmp.eq.s32.totalorder %s23, 0
      %p96 = por %p94, %p95
      %p97 = scmp.ne.s32.totalorder %s83, %s84
      %p98 = scmp.eq.s32.totalorder %s24, 1
      %p99 = por %p97, %p98
      %p101 = scmp.ne.s32.totalorder %s84, %s100
      %p102 = scmp.eq.s32.totalorder %s24, 0
      %p103 = por %p101, %p102
      %p104 = scmp.le.s32.totalorder 1, %s18
      %p105 = scmp.lt.s32.totalorder %s18, 3
      %p106 = pnand %p104, %p105
      %p107 = pneg %p106
      // Predicated region
      $region9: #{tpu_custom_call.1} parent=5 // pred_check
        _
      $region10: #{tpu_custom_call.1} parent=5 // pred_check_branch
        %109 = sbr.rel (%p106) target = $region12
      $region11: #{tpu_custom_call.1} parent=5 // pred_region
        %s110 = ssub.s32 %s18, 1
      $region12: #{tpu_custom_call.1} parent=5 // pred_fallthru
        _
      %p111 = scmp.lt.s32.totalorder %s18, 2
      // Predicated region
      $region13: #{tpu_custom_call.1} parent=5 // pred_check
        %p112 = pneg %p111
      $region14: #{tpu_custom_call.1} parent=5 // pred_check_branch
        %114 = sbr.rel (%p112) target = $region16
      $region15: #{tpu_custom_call.1} parent=5 // pred_region
        // Predicated region
        $region17: #{tpu_custom_call.1} parent=15 // pred_check
          %p115 = pneg %p38
        $region18: #{tpu_custom_call.1} parent=15 // pred_check_branch
          %117 = sbr.rel (%p115) target = $region20
        $region19: #{tpu_custom_call.1} parent=15 // pred_region
          %s118 = sand.u32 %s28, 1
          %s119 = scalar_lea.sflag [#allocation3], %s118
          %s120 = sand.u32 %s28, 1
          %s121 = smul.addr %s120, 8
          %s122 = scalar_lea.vmem [#allocation2], %s121
          %124 = vsyncadd %s119, 0
          %s125 = smul.addr %s18, 8
          %s126 = scalar_lea.hbm %s0, %s125
          %s128 = sshll.u32 %s126, 4
          %s129 = int_to_ptr.hbm [resolvable:$true] %s128
          %s130 = sshll.u32 %s122, 4
          %s131 = int_to_ptr.vmem [resolvable:$true] %s130
          %133 = dma.hbm_to_vmem [thread:$0]  %s129, 128, %s131, %s119
        $region20: #{tpu_custom_call.1} parent=15 // pred_fallthru
          _
      $region16: #{tpu_custom_call.1} parent=5 // pred_fallthru
        _
      %p134 = scmp.le.s32.totalorder 1, %s18
      %p135 = scmp.lt.s32.totalorder %s18, 3
      %p136 = pnand %p134, %p135
      %p137 = pneg %p136
      // Predicated region
      $region21: #{tpu_custom_call.1} parent=5 // pred_check
        _
      $region22: #{tpu_custom_call.1} parent=5 // pred_check_branch
        %139 = sbr.rel (%p136) target = $region24
      $region23: #{tpu_custom_call.1} parent=5 // pred_region
        %s140 = ssub.s32 %s18, 1
        %s141 = sand.u32 %s31, 1
        %s142 = scalar_lea.sflag [#allocation3], %s141
        %s143 = sand.u32 %s31, 1
        %s144 = smul.addr %s143, 8
        %s145 = scalar_lea.vmem [#allocation2], %s144
        // Predicated region
        $region25: #{tpu_custom_call.1} parent=23 // pred_check
          %p146 = pneg %p44
        $region26: #{tpu_custom_call.1} parent=23 // pred_check_branch
          %148 = sbr.rel (%p146) target = $region28
        $region27: #{tpu_custom_call.1} parent=23 // pred_region
          %150 = dma.done %s142, 128
        $region28: #{tpu_custom_call.1} parent=23 // pred_fallthru
          _
        %s151 = sand.u32 %s31, 1
        %s152 = scalar_lea.sflag [#allocation3], %s151
        %s153 = sand.u32 %s31, 1
        %s154 = smul.addr %s153, 8
        %s155 = scalar_lea.vmem [#allocation2], %s154
        %p156 = pneg %p44
        %p157 = pneg %p41
        %p158 = pneg %p70
        %p159 = pneg %p67
        %s160 = sand.u32 %s57, 1
        %s161 = scalar_lea.sflag [#allocation4], %s160
        %s162 = sand.u32 %s57, 1
        %s163 = smul.addr %s162, 8
        %s164 = scalar_lea.vmem [#allocation5], %s163
        %p165 = pneg %p96
        %p166 = pneg %p93
        %s167 = sand.u32 %s83, 1
        %s168 = scalar_lea.sflag [#allocation7], %s167
        %s169 = sand.u32 %s83, 1
        %s170 = smul.addr %s169, 8
        %s171 = scalar_lea.vmem [#allocation6], %s170
        %v172 = vld [vmem:[%s145] sm:$0xff]
        %174 = vset.pattern.permute.xlu0 0
        %175 = vperm.xlu0 %174, %v172
        %v176 = vpop.permute.xlu0 %175
        %178 = vset.pattern.permute.xlu0 15
        %179 = vperm.xlu0 %178, %v172
        %v180 = vpop.permute.xlu0 %179
        %182 = vrot.lane.b32.xlu0 %v172, 2
        %v183 = vpop.permute.xlu0 %182
        %vm185 = vcmask 15360
        %v186 = vsel %vm185, %v176, %v183
        %vm187 = vcmask 146432
        %v188 = vsel %vm187, %v186, %v180
        %190 = vrot.lane.b32.xlu0 %v188, 126
        %v191 = vpop.permute.xlu0 %190
        %v193 = vadd.f32 %v188, %v191
        %194 = vrot.lane.b32.xlu0 %v188, 124
        %v195 = vpop.permute.xlu0 %194
        %v197 = vadd.f32 %v193, %v195
        %199 = vrot.lane.b32.xlu0 %v193, 127
        %v200 = vpop.permute.xlu0 %199
        %v202 = vadd.f32 %v197, %v200
        %v203 = vmul.f32 %v202, 0.2
        %v204 = vsub.f32 %v172, %v203
        %vm205 = vcmask 130048
        %206 = vst.msk [vmem:[%s164] sm:$0xff] %vm205, %v204
        %207 = vst.msk [vmem:[%s171] sm:$0xff] %vm205, %v203
        %s208 = sand.u32 %s57, 1
        %s209 = scalar_lea.sflag [#allocation4], %s208
        %s210 = sand.u32 %s57, 1
        %s211 = smul.addr %s210, 8
        %s212 = scalar_lea.vmem [#allocation5], %s211
        %s213 = sand.u32 %s83, 1
        %s214 = scalar_lea.sflag [#allocation7], %s213
        %s215 = sand.u32 %s83, 1
        %s216 = smul.addr %s215, 8
        %s217 = scalar_lea.vmem [#allocation6], %s216
        // Predicated region
        $region29: #{tpu_custom_call.1} parent=23 // pred_check
          %p218 = pneg %p67
        $region30: #{tpu_custom_call.1} parent=23 // pred_check_branch
          %220 = sbr.rel (%p218) target = $region32
        $region31: #{tpu_custom_call.1} parent=23 // pred_region
          %222 = vsyncadd %s209, 0
          %s223 = smul.addr %s23, 8
          %s224 = scalar_lea.hbm %s1, %s223
          %s226 = sshll.u32 %s212, 4
          %s227 = int_to_ptr.vmem [resolvable:$true] %s226
          %s228 = sshll.u32 %s224, 4
          %s229 = int_to_ptr.hbm [resolvable:$true] %s228
          %231 = dma.vmem_to_hbm [thread:$0]  %s227, 128, %s229, %s209
        $region32: #{tpu_custom_call.1} parent=23 // pred_fallthru
          _
        // Predicated region
        $region33: #{tpu_custom_call.1} parent=23 // pred_check
          %p232 = pneg %p93
        $region34: #{tpu_custom_call.1} parent=23 // pred_check_branch
          %234 = sbr.rel (%p232) target = $region36
        $region35: #{tpu_custom_call.1} parent=23 // pred_region
          %236 = vsyncadd %s214, 0
          %s237 = smul.addr %s23, 8
          %s238 = scalar_lea.hbm %s2, %s237
          %s240 = sshll.u32 %s217, 4
          %s241 = int_to_ptr.vmem [resolvable:$true] %s240
          %s242 = sshll.u32 %s238, 4
          %s243 = int_to_ptr.hbm [resolvable:$true] %s242
          %245 = dma.vmem_to_hbm [thread:$0]  %s241, 128, %s243, %s214
        $region36: #{tpu_custom_call.1} parent=23 // pred_fallthru
          _
      $region24: #{tpu_custom_call.1} parent=5 // pred_fallthru
        _
      %p246 = scmp.le.s32.totalorder 2, %s18
      // Predicated region
      $region37: #{tpu_custom_call.1} parent=5 // pred_check
        %p247 = pneg %p246
      $region38: #{tpu_custom_call.1} parent=5 // pred_check_branch
        %249 = sbr.rel (%p247) target = $region40
      $region39: #{tpu_custom_call.1} parent=5 // pred_region
        %s250 = ssub.s32 %s18, 2
        // Predicated region
        $region41: #{tpu_custom_call.1} parent=39 // pred_check
          %p251 = pneg %p73
        $region42: #{tpu_custom_call.1} parent=39 // pred_check_branch
          %253 = sbr.rel (%p251) target = $region44
        $region43: #{tpu_custom_call.1} parent=39 // pred_region
          %s254 = sand.u32 %s58, 1
          %s255 = scalar_lea.sflag [#allocation4], %s254
          %s256 = sand.u32 %s58, 1
          %s257 = smul.addr %s256, 8
          %s258 = scalar_lea.vmem [#allocation5], %s257
          %260 = dma.done %s255, 128
        $region44: #{tpu_custom_call.1} parent=39 // pred_fallthru
          _
        // Predicated region
        $region45: #{tpu_custom_call.1} parent=39 // pred_check
          %p261 = pneg %p99
        $region46: #{tpu_custom_call.1} parent=39 // pred_check_branch
          %263 = sbr.rel (%p261) target = $region48
        $region47: #{tpu_custom_call.1} parent=39 // pred_region
          %s264 = sand.u32 %s84, 1
          %s265 = scalar_lea.sflag [#allocation7], %s264
          %s266 = sand.u32 %s84, 1
          %s267 = smul.addr %s266, 8
          %s268 = scalar_lea.vmem [#allocation6], %s267
          %270 = dma.done %s265, 128
        $region48: #{tpu_custom_call.1} parent=39 // pred_fallthru
          _
      $region40: #{tpu_custom_call.1} parent=5 // pred_fallthru
        _
    $region6: #{tpu_custom_call.1} parent=1 // loop_footer
      %s22 = sadd.s32 1, %s18
    $region7: #{tpu_custom_call.1} parent=1 // loop_footer_branch
      %17 = sbr.rel target = $region3
    $region8: #{tpu_custom_call.1} parent=1 // loop_exit
      _
    %271 = vsyncpa [#allocation3], 1
    %s272 = scalar_lea.sflag [#allocation3], 1
    %273 = vsyncpa %s272, 1
    %274 = vsyncpa [#allocation4], 1
    %s275 = scalar_lea.sflag [#allocation4], 1
    %276 = vsyncpa %s275, 1
    %277 = vsyncpa [#allocation7], 1
    %s278 = scalar_lea.sflag [#allocation7], 1
    %279 = vsyncpa %s278, 1

</llo_original>
